<compile_context>
chip_gen: v6e
topology: v6e:2x2x1
jax: 0.10.0
libtpu: 0.0.40
codegen_flags: <defaults>
</compile_context>

<pallas_src>
import functools

import numpy as np
import jax
import jax.numpy as jnp
from jax.experimental import pallas as pl
from jax.experimental.pallas import tpu as pltpu


# ---------------------------------------------------------------------------
# Pallas kernel: one batch tile (bt, N, D) per grid step, everything in VMEM.
# ---------------------------------------------------------------------------
def class_attn_kernel(x_ref, wq_ref, wkv_ref, hmask_ref, hmaskT_ref, wp_ref,
                      bp_ref, o_ref, *, scale):
    bt, n_tok, d_in = x_ref.shape
    e_dim = wq_ref.shape[1]

    xb = x_ref[...]                                    # (bt, N, D) bf16 slab
    x2 = xb.reshape(bt * n_tok, d_in)

    # ---- fused k|v projection: ONE (bt*N, D) @ (D, 2E) matmul, f32 acc -----
    kv = jnp.dot(x2, wkv_ref[...], preferred_element_type=jnp.float32)
    k = kv[:, :e_dim].astype(jnp.bfloat16).reshape(bt, n_tok, e_dim)
    v = kv[:, e_dim:].astype(jnp.bfloat16).reshape(bt, n_tok, e_dim)

    # ---- q projection for the class rows only, straight from the ref -------
    q = jnp.dot(x_ref[:, 0, :], wq_ref[...], preferred_element_type=jnp.float32)
    q = (q * scale).astype(jnp.bfloat16)               # (bt, E)

    # ---- scores: VPU elementwise q*k, head-sum via ONE mask matmul ---------
    qk = (q[:, None, :] * k).reshape(bt * n_tok, e_dim)            # bf16
    s = jnp.dot(qk, hmask_ref[...], preferred_element_type=jnp.float32)
    s = s.reshape(bt, n_tok, -1)                                    # (bt, N, H)

    # ---- softmax over the token axis; statistics in f32 --------------------
    s = s - jnp.max(s, axis=1, keepdims=True)
    ez = jnp.exp(s)
    p = ez * pl.reciprocal(jnp.sum(ez, axis=1, keepdims=True), approx=True)

    # ---- PV: ONE (bt*N, H) @ (H, E) mask matmul broadcasts the probs over
    #      each head's lanes, then broadcast-multiply + sublane reduce --------
    p_full = jnp.dot(p.astype(jnp.bfloat16).reshape(bt * n_tok, -1),
                     hmaskT_ref[...],
                     preferred_element_type=jnp.float32).astype(jnp.bfloat16)
    p_full = p_full.reshape(bt, n_tok, e_dim)
    o_cat = jnp.sum((p_full * v).astype(jnp.float32), axis=1)      # (bt, E)

    # ---- ONE output projection + bias; lane-dense (bt, D) store ------------
    out = jnp.dot(o_cat.astype(jnp.bfloat16), wp_ref[...],
                  preferred_element_type=jnp.float32) + bp_ref[...]
    o_ref[...] = out.astype(o_ref.dtype)


# ---------------------------------------------------------------------------
# Batch-tile selection: divisor of B, prefer >=2 (8-aligned) grid steps.
# ---------------------------------------------------------------------------
def _pick_batch_tile(B, block_b):
    cap = min(block_b, B)
    single_step = None
    for cand in range(cap - cap % 8, 7, -8):          # 8-aligned candidates
        if B % cand == 0:
            if B // cand >= 2:
                return cand                           # >=2 steps (v7x megacore)
            if single_step is None:
                single_step = cand
    if single_step is not None:
        return single_step
    if B <= block_b:
        return B                                      # tiny / odd batch: 1 step
    return 0                                          # caller pads (rare)


# ---------------------------------------------------------------------------
# Wrapper
# ---------------------------------------------------------------------------
def class_attn(x, params, *, num_heads, dim_embed, block_b=128):
    """ClassAttn forward.  x: (B, N, D) -> (B, 1, D)."""
    B, N, D = x.shape
    E = dim_embed
    assert E % num_heads == 0
    head_dim = E // num_heads

    bt = _pick_batch_tile(B, block_b)
    xin = x.astype(jnp.bfloat16)                      # stream activations bf16
    if bt == 0:                                       # rare: no clean divisor
        assert block_b % 8 == 0
        bt = block_b
        b_pad = pl.cdiv(B, bt) * bt
        xin = jnp.pad(xin, ((0, b_pad - B), (0, 0), (0, 0)))
    else:
        b_pad = B

    # bf16 weights (f32 accumulation on the MXU); k|v fused into one matrix.
    wq = params["wq"].astype(jnp.bfloat16)                              # (D, E)
    wkv = jnp.concatenate([params["wk"], params["wv"]], 1).astype(jnp.bfloat16)
    wp = params["wp"].astype(jnp.bfloat16)                              # (E, D)
    bp = params["bp"].astype(jnp.float32)                               # (1, D)

    # block-one-hot head mask: hmask[e, h] = 1 iff lane e belongs to head h
    hmask = (jnp.arange(E)[:, None] // head_dim
             == jnp.arange(num_heads)[None, :]).astype(jnp.bfloat16)    # (E, H)
    hmaskT = hmask.T                                                    # (H, E)

    kernel = functools.partial(class_attn_kernel, scale=head_dim ** -0.5)

    flops = int(2 * b_pad * N * D * (2 * E)        # fused k|v projection
                + 2 * b_pad * D * E                # q projection (class rows)
                + 2 * b_pad * E * D                # output projection
                + 4 * b_pad * N * E * num_heads)   # head-mask score/prob matmuls
    bytes_accessed = int(xin.size * 2 + wq.size * 2 + wkv.size * 2
                         + wp.size * 2 + bp.size * 4 + 2 * hmask.size * 2
                         + b_pad * D * jnp.dtype(x.dtype).itemsize)
    cost = pl.CostEstimate(flops=flops,
                           transcendentals=int(b_pad * N * num_heads),
                           bytes_accessed=bytes_accessed)

    out2d = pl.pallas_call(
        kernel,
        out_shape=jax.ShapeDtypeStruct((b_pad, D), x.dtype),
        grid=(b_pad // bt,),
        in_specs=[
            pl.BlockSpec((bt, N, D), lambda b: (b, 0, 0)),      # token slab
            pl.BlockSpec((D, E), lambda b: (0, 0)),             # Wq (constant)
            pl.BlockSpec((D, 2 * E), lambda b: (0, 0)),         # Wk|Wv fused
            pl.BlockSpec((E, num_heads), lambda b: (0, 0)),     # head mask
            pl.BlockSpec((num_heads, E), lambda b: (0, 0)),     # head mask^T
            pl.BlockSpec((E, D), lambda b: (0, 0)),             # Wproj
            pl.BlockSpec((1, D), lambda b: (0, 0)),             # proj bias
        ],
        out_specs=pl.BlockSpec((bt, D), lambda b: (b, 0)),      # lane-dense slab
        compiler_params=pltpu.CompilerParams(
            dimension_semantics=("parallel",),                  # megacore on v7x
            vmem_limit_bytes=32 * 1024 * 1024),                 # raise for prod dims
        cost_estimate=cost,
    )(xin, wq, wkv, hmask, hmaskT, wp, bp)

    return out2d[:B, None, :]                                   # (B, 1, D)


# ---------------------------------------------------------------------------
# Deterministic parameters (match nn.Module shapes; qkv_bias=False)
# ---------------------------------------------------------------------------
def make_params(key, dim, dim_embed):
    ks = jax.random.split(key, 5)
    s = 0.02
    return {
        "wq": s * jax.random.normal(ks[0], (dim, dim_embed), jnp.float32),
        "wk": s * jax.random.normal(ks[1], (dim, dim_embed), jnp.float32),
        "wv": s * jax.random.normal(ks[2], (dim, dim_embed), jnp.float32),
        "wp": s * jax.random.normal(ks[3], (dim_embed, dim), jnp.float32),
        "bp": s * jax.random.normal(ks[4], (1, dim), jnp.float32),
    }


# ---------------------------------------------------------------------------
# Pure-JAX reference mirroring the PyTorch forward (for validation)
# ---------------------------------------------------------------------------
def class_attn_reference(x, params, *, num_heads, dim_embed):
    B, N, D = x.shape
    hd = dim_embed // num_heads
    q = (x[:, 0] @ params["wq"]).reshape(B, num_heads, hd) * (hd ** -0.5)
    k = (x @ params["wk"]).reshape(B, N, num_heads, hd)
    v = (x @ params["wv"]).reshape(B, N, num_heads, hd)
    attn = jnp.einsum("bhd,bnhd->bhn", q, k)
    attn = jax.nn.softmax(attn, axis=-1)
    o = jnp.einsum("bhn,bnhd->bhd", attn, v).reshape(B, dim_embed)
    out = o @ params["wp"] + params["bp"][0]
    return out[:, None, :]                                      # (B, 1, D)


if __name__ == "__main__":
    # small shapes consistent with the module
    B, N, dim = 2, 16, 64
    num_heads, dim_embed = 4, 32

    key = jax.random.PRNGKey(0)
    kx, kp = jax.random.split(key)
    x = jax.random.normal(kx, (B, N, dim), jnp.float32)
    params = make_params(kp, dim, dim_embed)

    out = class_attn(x, params, num_heads=num_heads, dim_embed=dim_embed)
    out = jax.block_until_ready(out)
    assert out.shape == (B, 1, dim)

    ref = class_attn_reference(x, params, num_heads=num_heads,
                               dim_embed=dim_embed)
    # bf16 matmul inputs / intermediates with f32 accumulation vs f32 reference
    np.testing.assert_allclose(np.asarray(out), np.asarray(ref),
                               rtol=2e-2, atol=5e-3)
    print("KERNEL_OK")
</pallas_src>

<mosaic_0001>
module attributes {stable_mosaic.version = 11 : i64} {
  func.func @class_attn_kernel(%arg0: i32, %arg1: memref<2x16x64xbf16, #tpu.memory_space<vmem>>, %arg2: memref<64x32xbf16, #tpu.memory_space<vmem>>, %arg3: memref<64x64xbf16, #tpu.memory_space<vmem>>, %arg4: memref<32x4xbf16, #tpu.memory_space<vmem>>, %arg5: memref<4x32xbf16, #tpu.memory_space<vmem>>, %arg6: memref<32x64xbf16, #tpu.memory_space<vmem>>, %arg7: memref<1x64xf32, #tpu.memory_space<vmem>>, %arg8: memref<2x64xf32, #tpu.memory_space<vmem>>) attributes {dimension_semantics = [#tpu.dimension_semantics<parallel>], iteration_bounds = array<i64: 1>, scalar_prefetch = 0 : i64, scratch_operands = 0 : i64, tpu.core_type = #tpu.core_type<tc>, window_params = [{transform_indices = @transform_0, window_bounds = array<i64: 2, 16, 64>}, {pipeline_mode = #tpu.pipeline_mode<synchronous>, transform_indices = @transform_1, window_bounds = array<i64: 64, 32>}, {pipeline_mode = #tpu.pipeline_mode<synchronous>, transform_indices = @transform_2, window_bounds = array<i64: 64, 64>}, {pipeline_mode = #tpu.pipeline_mode<synchronous>, transform_indices = @transform_3, window_bounds = array<i64: 32, 4>}, {pipeline_mode = #tpu.pipeline_mode<synchronous>, transform_indices = @transform_4, window_bounds = array<i64: 4, 32>}, {pipeline_mode = #tpu.pipeline_mode<synchronous>, transform_indices = @transform_5, window_bounds = array<i64: 32, 64>}, {pipeline_mode = #tpu.pipeline_mode<synchronous>, transform_indices = @transform_6, window_bounds = array<i64: 1, 64>}, {transform_indices = @transform_7, window_bounds = array<i64: 2, 64>}]} {
    %c0 = arith.constant 0 : index
    %c0_0 = arith.constant 0 : index
    %c0_1 = arith.constant 0 : index
    %0 = vector.load %arg1[%c0, %c0_0, %c0_1] : memref<2x16x64xbf16, #tpu.memory_space<vmem>>, vector<2x16x64xbf16>
    %1 = vector.shape_cast %0 : vector<2x16x64xbf16> to vector<32x64xbf16>
    %c0_2 = arith.constant 0 : index
    %c0_3 = arith.constant 0 : index
    %2 = vector.load %arg3[%c0_2, %c0_3] : memref<64x64xbf16, #tpu.memory_space<vmem>>, vector<64x64xbf16>
    %cst = arith.constant dense<0.000000e+00> : vector<32x64xf32>
    %3 = tpu.matmul %1, %2, %cst {dimension_numbers = #tpu.dot_dimension_numbers<[1], [0], [0], [1], [0, 0, 1, 1], [], []>} : vector<32x64xbf16>, vector<64x64xbf16>, vector<32x64xf32> -> vector<32x64xf32>
    %4 = vector.extract_strided_slice %3 {offsets = [0, 0], sizes = [32, 32], strides = [1, 1]} : vector<32x64xf32> to vector<32x32xf32>
    %5 = arith.truncf %4 : vector<32x32xf32> to vector<32x32xbf16>
    %6 = vector.shape_cast %5 : vector<32x32xbf16> to vector<2x16x32xbf16>
    %7 = vector.extract_strided_slice %3 {offsets = [0, 32], sizes = [32, 32], strides = [1, 1]} : vector<32x64xf32> to vector<32x32xf32>
    %8 = arith.truncf %7 : vector<32x32xf32> to vector<32x32xbf16>
    %9 = vector.shape_cast %8 : vector<32x32xbf16> to vector<2x16x32xbf16>
    %c0_4 = arith.constant 0 : index
    %c0_5 = arith.constant 0 : index
    %c0_6 = arith.constant 0 : index
    %10 = vector.load %arg1[%c0_4, %c0_5, %c0_6] : memref<2x16x64xbf16, #tpu.memory_space<vmem>>, vector<2x1x64xbf16>
    %11 = vector.shape_cast %10 : vector<2x1x64xbf16> to vector<2x64xbf16>
    %c0_7 = arith.constant 0 : index
    %c0_8 = arith.constant 0 : index
    %12 = vector.load %arg2[%c0_7, %c0_8] : memref<64x32xbf16, #tpu.memory_space<vmem>>, vector<64x32xbf16>
    %cst_9 = arith.constant dense<0.000000e+00> : vector<2x32xf32>
    %13 = tpu.matmul %11, %12, %cst_9 {dimension_numbers = #tpu.dot_dimension_numbers<[1], [0], [0], [1], [0, 0, 1, 1], [], []>} : vector<2x64xbf16>, vector<64x32xbf16>, vector<2x32xf32> -> vector<2x32xf32>
    %cst_10 = arith.constant 0.353553385 : f32
    %14 = vector.broadcast %cst_10 : f32 to vector<2x32xf32>
    %15 = arith.mulf %13, %14 : vector<2x32xf32>
    %16 = arith.truncf %15 : vector<2x32xf32> to vector<2x32xbf16>
    %17 = vector.shape_cast %16 : vector<2x32xbf16> to vector<2x1x32xbf16>
    %18 = vector.broadcast %17 : vector<2x1x32xbf16> to vector<2x16x32xbf16>
    %19 = arith.mulf %18, %6 : vector<2x16x32xbf16>
    %20 = vector.shape_cast %19 : vector<2x16x32xbf16> to vector<32x32xbf16>
    %c0_11 = arith.constant 0 : index
    %c0_12 = arith.constant 0 : index
    %21 = vector.load %arg4[%c0_11, %c0_12] : memref<32x4xbf16, #tpu.memory_space<vmem>>, vector<32x4xbf16>
    %cst_13 = arith.constant dense<0.000000e+00> : vector<32x4xf32>
    %22 = tpu.matmul %20, %21, %cst_13 {dimension_numbers = #tpu.dot_dimension_numbers<[1], [0], [0], [1], [0, 0, 1, 1], [], []>} : vector<32x32xbf16>, vector<32x4xbf16>, vector<32x4xf32> -> vector<32x4xf32>
    %23 = vector.shape_cast %22 : vector<32x4xf32> to vector<2x16x4xf32>
    %cst_14 = arith.constant dense<0xFF800000> : vector<2x4xf32>
    %24 = vector.multi_reduction <maximumf>, %23, %cst_14 [1] : vector<2x16x4xf32> to vector<2x4xf32>
    %25 = vector.shape_cast %24 : vector<2x4xf32> to vector<2x1x4xf32>
    %26 = vector.broadcast %25 : vector<2x1x4xf32> to vector<2x16x4xf32>
    %27 = arith.subf %23, %26 : vector<2x16x4xf32>
    %28 = math.exp %27 : vector<2x16x4xf32>
    %cst_15 = arith.constant dense<0.000000e+00> : vector<2x4xf32>
    %29 = vector.multi_reduction <add>, %28, %cst_15 [1] : vector<2x16x4xf32> to vector<2x4xf32>
    %30 = vector.shape_cast %29 : vector<2x4xf32> to vector<2x1x4xf32>
    %31 = tpu.reciprocal %30 {approx = true} : vector<2x1x4xf32> -> vector<2x1x4xf32>
    %32 = vector.broadcast %31 : vector<2x1x4xf32> to vector<2x16x4xf32>
    %33 = arith.mulf %28, %32 : vector<2x16x4xf32>
    %34 = arith.truncf %33 : vector<2x16x4xf32> to vector<2x16x4xbf16>
    %35 = vector.shape_cast %34 : vector<2x16x4xbf16> to vector<32x4xbf16>
    %c0_16 = arith.constant 0 : index
    %c0_17 = arith.constant 0 : index
    %36 = vector.load %arg5[%c0_16, %c0_17] : memref<4x32xbf16, #tpu.memory_space<vmem>>, vector<4x32xbf16>
    %cst_18 = arith.constant dense<0.000000e+00> : vector<32x32xf32>
    %37 = tpu.matmul %35, %36, %cst_18 {dimension_numbers = #tpu.dot_dimension_numbers<[1], [0], [0], [1], [0, 0, 1, 1], [], []>} : vector<32x4xbf16>, vector<4x32xbf16>, vector<32x32xf32> -> vector<32x32xf32>
    %38 = arith.truncf %37 : vector<32x32xf32> to vector<32x32xbf16>
    %39 = vector.shape_cast %38 : vector<32x32xbf16> to vector<2x16x32xbf16>
    %40 = arith.mulf %39, %9 : vector<2x16x32xbf16>
    %41 = arith.extf %40 : vector<2x16x32xbf16> to vector<2x16x32xf32>
    %cst_19 = arith.constant dense<0.000000e+00> : vector<2x32xf32>
    %42 = vector.multi_reduction <add>, %41, %cst_19 [1] : vector<2x16x32xf32> to vector<2x32xf32>
    %43 = arith.truncf %42 : vector<2x32xf32> to vector<2x32xbf16>
    %c0_20 = arith.constant 0 : index
    %c0_21 = arith.constant 0 : index
    %44 = vector.load %arg6[%c0_20, %c0_21] : memref<32x64xbf16, #tpu.memory_space<vmem>>, vector<32x64xbf16>
    %cst_22 = arith.constant dense<0.000000e+00> : vector<2x64xf32>
    %45 = tpu.matmul %43, %44, %cst_22 {dimension_numbers = #tpu.dot_dimension_numbers<[1], [0], [0], [1], [0, 0, 1, 1], [], []>} : vector<2x32xbf16>, vector<32x64xbf16>, vector<2x64xf32> -> vector<2x64xf32>
    %c0_23 = arith.constant 0 : index
    %c0_24 = arith.constant 0 : index
    %46 = vector.load %arg7[%c0_23, %c0_24] : memref<1x64xf32, #tpu.memory_space<vmem>>, vector<1x64xf32>
    %47 = vector.broadcast %46 : vector<1x64xf32> to vector<2x64xf32>
    %48 = arith.addf %45, %47 : vector<2x64xf32>
    %c0_25 = arith.constant 0 : index
    %c0_26 = arith.constant 0 : index
    %49 = vector.load %arg8[%c0_25, %c0_26] : memref<2x64xf32, #tpu.memory_space<vmem>>, vector<2x64xf32>
    tpu.vector_store %arg8[%c0_25, %c0_26], %48 {strides = array<i32>} : memref<2x64xf32, #tpu.memory_space<vmem>>, vector<2x64xf32>,
    return
  }
  func.func @transform_0(%arg0: i32) -> (i32, i32, i32) {
    %c0_i32 = arith.constant 0 : i32
    %c0_i32_0 = arith.constant 0 : i32
    %c0_i32_1 = arith.constant 0 : i32
    return %arg0, %c0_i32, %c0_i32_0 : i32, i32, i32
  }
  func.func @transform_1(%arg0: i32) -> (i32, i32) {
    %c0_i32 = arith.constant 0 : i32
    %c0_i32_0 = arith.constant 0 : i32
    %c0_i32_1 = arith.constant 0 : i32
    return %c0_i32, %c0_i32_0 : i32, i32
  }
  func.func @transform_2(%arg0: i32) -> (i32, i32) {
    %c0_i32 = arith.constant 0 : i32
    %c0_i32_0 = arith.constant 0 : i32
    %c0_i32_1 = arith.constant 0 : i32
    return %c0_i32, %c0_i32_0 : i32, i32
  }
  func.func @transform_3(%arg0: i32) -> (i32, i32) {
    %c0_i32 = arith.constant 0 : i32
    %c0_i32_0 = arith.constant 0 : i32
    %c0_i32_1 = arith.constant 0 : i32
    return %c0_i32, %c0_i32_0 : i32, i32
  }
  func.func @transform_4(%arg0: i32) -> (i32, i32) {
    %c0_i32 = arith.constant 0 : i32
    %c0_i32_0 = arith.constant 0 : i32
    %c0_i32_1 = arith.constant 0 : i32
    return %c0_i32, %c0_i32_0 : i32, i32
  }
  func.func @transform_5(%arg0: i32) -> (i32, i32) {
    %c0_i32 = arith.constant 0 : i32
    %c0_i32_0 = arith.constant 0 : i32
    %c0_i32_1 = arith.constant 0 : i32
    return %c0_i32, %c0_i32_0 : i32, i32
  }
  func.func @transform_6(%arg0: i32) -> (i32, i32) {
    %c0_i32 = arith.constant 0 : i32
    %c0_i32_0 = arith.constant 0 : i32
    %c0_i32_1 = arith.constant 0 : i32
    return %c0_i32, %c0_i32_0 : i32, i32
  }
  func.func @transform_7(%arg0: i32) -> (i32, i32) {
    %c0_i32 = arith.constant 0 : i32
    %c0_i32_0 = arith.constant 0 : i32
    return %arg0, %c0_i32 : i32, i32
  }
}

</mosaic_0001>

<llo_original>
// kernel: tpu_custom_call.1
$region0: #{tpu_custom_call.1}
  #allocation0 [shape = 'u32[]', space=smem, size = 0x4, offset = 0x4, fixed_abs, tag = 'smem constant byte address 0x4 - core index']
  #allocation1 [shape = 'u32[144,128]{1,0:T(1,128)}', space=vmem, size = 0x12000, scoped, tag = 'internal scratch']
  %s0 = inlined_call_operand.vmem [shape: bf16[2,16,64], index: 0, kind: input, shape index: {}]
  %s1 = inlined_call_operand.vmem [shape: bf16[64,32], index: 1, kind: input, shape index: {}]
  %s2 = inlined_call_operand.vmem [shape: bf16[64,64], index: 2, kind: input, shape index: {}]
  %s3 = inlined_call_operand.vmem [shape: bf16[32,4], index: 3, kind: input, shape index: {}]
  %s4 = inlined_call_operand.vmem [shape: bf16[4,32], index: 4, kind: input, shape index: {}]
  %s5 = inlined_call_operand.vmem [shape: bf16[32,64], index: 5, kind: input, shape index: {}]
  %s6 = inlined_call_operand.vmem [shape: f32[1,64], index: 6, kind: input, shape index: {}]
  %s7 = inlined_call_operand.hbm [shape: f32[2,64], index: 7, kind: output, shape index: {}]
  %s8 = sld [smem:[#allocation0]]
  $region38: #{tpu_custom_call.1} parent=0
    _
  %s10 = ssub.s32 1, %s8
  %s11 = scalar_select 0, %s10, %s8
  $region1: #{tpu_custom_call.1} parent=0
    #allocation2 [shape = 'u8[1024]{0}', space=vmem, size = 0x400, scoped, tag = 'output window, operand 0, single buffered']
    #allocation3 [shape = 's32[1]{0}', space=sflag, size = 0x4, scoped, tag = 'scoped memory for tpu_custom_call.1']
    %12 = vsyncpa [#allocation3], 0
    // Predicated region
    $region2: #{tpu_custom_call.1} parent=1 // pred_check
      _
    $region3: #{tpu_custom_call.1} parent=1 // pred_check_branch
      %14 = sbr.rel (0) target = $region5
    $region4: #{tpu_custom_call.1} parent=1 // pred_region
      _
    $region5: #{tpu_custom_call.1} parent=1 // pred_fallthru
      _
    // Predicated region
    $region6: #{tpu_custom_call.1} parent=1 // pred_check
      _
    $region7: #{tpu_custom_call.1} parent=1 // pred_check_branch
      %16 = sbr.rel (0) target = $region9
    $region8: #{tpu_custom_call.1} parent=1 // pred_region
      _
    $region9: #{tpu_custom_call.1} parent=1 // pred_fallthru
      _
    // Predicated region
    $region10: #{tpu_custom_call.1} parent=1 // pred_check
      _
    $region11: #{tpu_custom_call.1} parent=1 // pred_check_branch
      %18 = sbr.rel (0) target = $region13
    $region12: #{tpu_custom_call.1} parent=1 // pred_region
      _
    $region13: #{tpu_custom_call.1} parent=1 // pred_fallthru
      _
    // Predicated region
    $region14: #{tpu_custom_call.1} parent=1 // pred_check
      _
    $region15: #{tpu_custom_call.1} parent=1 // pred_check_branch
      %20 = sbr.rel (0) target = $region17
    $region16: #{tpu_custom_call.1} parent=1 // pred_region
      _
    $region17: #{tpu_custom_call.1} parent=1 // pred_fallthru
      _
    // Predicated region
    $region18: #{tpu_custom_call.1} parent=1 // pred_check
      _
    $region19: #{tpu_custom_call.1} parent=1 // pred_check_branch
      %22 = sbr.rel (0) target = $region21
    $region20: #{tpu_custom_call.1} parent=1 // pred_region
      _
    $region21: #{tpu_custom_call.1} parent=1 // pred_fallthru
      _
    // Predicated region
    $region22: #{tpu_custom_call.1} parent=1 // pred_check
      _
    $region23: #{tpu_custom_call.1} parent=1 // pred_check_branch
      %24 = sbr.rel (0) target = $region25
    $region24: #{tpu_custom_call.1} parent=1 // pred_region
      _
    $region25: #{tpu_custom_call.1} parent=1 // pred_fallthru
      _
    // Predicated region
    $region26: #{tpu_custom_call.1} parent=1 // pred_check
      _
    $region27: #{tpu_custom_call.1} parent=1 // pred_check_branch
      %26 = sbr.rel (0) target = $region29
    $region28: #{tpu_custom_call.1} parent=1 // pred_region
      _
    $region29: #{tpu_custom_call.1} parent=1 // pred_fallthru
      _
    %v28 = vld [vmem:[%s0] sm:$0xf]
    %v29 = vld [vmem:[%s0 + $0x4] sm:$0xf]
    %v30 = vld [vmem:[%s0 + $0x8] sm:$0xf]
    %v31 = vld [vmem:[%s0 + $0xc] sm:$0xf]
    %v32 = vld [vmem:[%s2] sm:$0xf]
    %v33 = vld [vmem:[%s2 + $0x4] sm:$0xf]
    %v34 = vld [vmem:[%s2 + $0x8] sm:$0xf]
    %v35 = vld [vmem:[%s2 + $0xc] sm:$0xf]
    %v36 = vld [vmem:[%s2 + $0x10] sm:$0xf]
    %v37 = vld [vmem:[%s2 + $0x14] sm:$0xf]
    %v38 = vld [vmem:[%s2 + $0x18] sm:$0xf]
    %v39 = vld [vmem:[%s2 + $0x1c] sm:$0xf]
    %v44 = vunpack.c.l.b16 %v28
    %v45 = vunpack.c.l.b16 %v29
    %v46 = vunpack.c.l.b16 %v30
    %v47 = vunpack.c.l.b16 %v31
    %v48 = vpack.c.b16 %v45, %v44
    %v49 = vpack.c.b16 %v47, %v46
    %v58 = vunpack.c.l.b16 %v32
    %v59 = vunpack.c.l.b16 %v33
    %v60 = vunpack.c.l.b16 %v34
    %v61 = vunpack.c.l.b16 %v35
    %v62 = vunpack.c.l.b16 %v36
    %v63 = vunpack.c.l.b16 %v37
    %v64 = vunpack.c.l.b16 %v38
    %v65 = vunpack.c.l.b16 %v39
    %v66 = vpack.c.b16 %v59, %v58
    %v67 = vpack.c.b16 %v61, %v60
    %v68 = vpack.c.b16 %v63, %v62
    %v69 = vpack.c.b16 %v65, %v64
    %vm74 = vcmask 523264
    %v76 = vsel %vm74, %v48, 0
    %v79 = vsel %vm74, %v49, 0
    %81 = vmatprep.subr.bf16.mxu0 0
    %82 = vmatpush1.bf16.msra.mxu0 0
    %83 = vmatprep.subr.bf16.mxu0 0
    %84 = vmatpush1.bf16.msra.mxu0 0
    %85 = vmatprep.subr.bf16.mxu0 0
    %86 = vmatpush1.bf16.msra.mxu0 0
    %87 = vmatprep.subr.bf16.mxu0 0
    %88 = vmatpush1.bf16.msra.mxu0 0
    %89 = vmatprep.subr.bf16.mxu0 0
    %90 = vmatpush1.bf16.msra.mxu0 %v69
    %91 = vmatprep.subr.bf16.mxu0 0
    %92 = vmatpush1.bf16.msra.mxu0 %v68
    %93 = vmatprep.subr.bf16.mxu0 0
    %94 = vmatpush1.bf16.msra.mxu0 %v67
    %95 = vmatprep.subr.bf16.mxu0 0
    %96 = vmatpush1.bf16.msra.mxu0 %v66
    %97 = vmatprep.subr.bf16.mxu0 0
    %98 = vmatpush2.bf16.msra.mxu0 0
    %99 = vmatprep.subr.bf16.mxu0 0
    %100 = vmatpush2.bf16.msra.mxu0 0
    %101 = vmatprep.subr.bf16.mxu0 0
    %102 = vmatpush2.bf16.msra.mxu0 0
    %103 = vmatprep.subr.bf16.mxu0 0
    %104 = vmatpush2.bf16.msra.mxu0 0
    %105 = vmatprep.subr.bf16.mxu0 0
    %106 = vmatpush2.bf16.msra.mxu0 0
    %107 = vmatprep.subr.bf16.mxu0 0
    %108 = vmatpush2.bf16.msra.mxu0 0
    %109 = vmatprep.subr.bf16.mxu0 0
    %110 = vmatpush2.bf16.msra.mxu0 0
    %111 = vmatprep.subr.bf16.mxu0 0
    %112 = vmatpush2.bf16.msra.mxu0 0
    %113 = vmatprep.mubr.bf16.mxu0 0
    %114 = vmatmul.mubr.bf16.gmra.mxu0 %v76
    %v115 = vpop.f32.mrf.mxu0
    %v116 = vadd.f32 0.0, %v115
    %v117 = vpop.f32.mrf.mxu0
    %v118 = vpop.f32.mrf.mxu0
    %v119 = vadd.f32 0.0, %v118
    %v120 = vpop.f32.mrf.mxu0
    %121 = vmatprep.mubr.bf16.mxu0 0
    %122 = vmatmul.mubr.bf16.gmra.mxu0 %v79
    %v123 = vpop.f32.mrf.mxu0
    %v124 = vadd.f32 0.0, %v123
    %v125 = vpop.f32.mrf.mxu0
    %v126 = vpop.f32.mrf.mxu0
    %v127 = vadd.f32 0.0, %v126
    %v128 = vpop.f32.mrf.mxu0
    %129 = vdwg.mxu0
    %v130 = vpack.c.bf16 %v119, %v116
    %v131 = vpack.c.bf16 %v127, %v124
    %v132 = vld [vmem:[%s0] sm:$0x1]
    %v133 = vld [vmem:[%s0 + $0x8] sm:$0x1]
    %v134 = vld [vmem:[%s1] sm:$0xf]
    %v135 = vld [vmem:[%s1 + $0x4] sm:$0xf]
    %v136 = vld [vmem:[%s1 + $0x8] sm:$0xf]
    %v137 = vld [vmem:[%s1 + $0xc] sm:$0xf]
    %v138 = vld [vmem:[%s1 + $0x10] sm:$0xf]
    %v139 = vld [vmem:[%s1 + $0x14] sm:$0xf]
    %v140 = vld [vmem:[%s1 + $0x18] sm:$0xf]
    %v141 = vld [vmem:[%s1 + $0x1c] sm:$0xf]
    %v144 = vunpack.c.l.b16 %v132
    %v145 = vunpack.c.l.b16 %v133
    %v146 = vpack.c.b16 %v144, %v144
    %v147 = vpack.c.b16 %v145, %v145
    %v148 = vunpack.c.l.b16 %v146
    %v149 = vunpack.c.l.b16 %v147
    %v150 = vrot.slane %v149, 7
    %vm151 = vcmask 1041409
    %v152 = vsel %vm151, %v150, %v148
    %v153 = vpack.c.b16 %v152, %v152
    %v162 = vunpack.c.l.b16 %v134
    %v163 = vunpack.c.l.b16 %v135
    %v164 = vunpack.c.l.b16 %v136
    %v165 = vunpack.c.l.b16 %v137
    %v166 = vunpack.c.l.b16 %v138
    %v167 = vunpack.c.l.b16 %v139
    %v168 = vunpack.c.l.b16 %v140
    %v169 = vunpack.c.l.b16 %v141
    %v170 = vpack.c.b16 %v163, %v162
    %v171 = vpack.c.b16 %v165, %v164
    %v172 = vpack.c.b16 %v167, %v166
    %v173 = vpack.c.b16 %v169, %v168
    %v179 = vsel %vm74, %v153, 0
    %181 = vmatprep.subr.bf16.mxu0 0
    %182 = vmatpush1.bf16.msra.mxu0 0
    %183 = vmatprep.subr.bf16.mxu0 0
    %184 = vmatpush1.bf16.msra.mxu0 0
    %185 = vmatprep.subr.bf16.mxu0 0
    %186 = vmatpush1.bf16.msra.mxu0 0
    %187 = vmatprep.subr.bf16.mxu0 0
    %188 = vmatpush1.bf16.msra.mxu0 0
    %189 = vmatprep.subr.bf16.mxu0 0
    %190 = vmatpush1.bf16.msra.mxu0 %v173
    %191 = vmatprep.subr.bf16.mxu0 0
    %192 = vmatpush1.bf16.msra.mxu0 %v172
    %193 = vmatprep.subr.bf16.mxu0 0
    %194 = vmatpush1.bf16.msra.mxu0 %v171
    %195 = vmatprep.subr.bf16.mxu0 0
    %196 = vmatpush1.bf16.msra.mxu0 %v170
    %197 = vmatprep.subr.bf16.mxu0 0
    %198 = vmatpush2.bf16.msra.mxu0 0
    %199 = vmatprep.subr.bf16.mxu0 0
    %200 = vmatpush2.bf16.msra.mxu0 0
    %201 = vmatprep.subr.bf16.mxu0 0
    %202 = vmatpush2.bf16.msra.mxu0 0
    %203 = vmatprep.subr.bf16.mxu0 0
    %204 = vmatpush2.bf16.msra.mxu0 0
    %205 = vmatprep.subr.bf16.mxu0 0
    %206 = vmatpush2.bf16.msra.mxu0 0
    %207 = vmatprep.subr.bf16.mxu0 0
    %208 = vmatpush2.bf16.msra.mxu0 0
    %209 = vmatprep.subr.bf16.mxu0 0
    %210 = vmatpush2.bf16.msra.mxu0 0
    %211 = vmatprep.subr.bf16.mxu0 0
    %212 = vmatpush2.bf16.msra.mxu0 0
    %213 = vmatprep.mubr.bf16.mxu0 0
    %214 = vmatmul.mubr.bf16.gmra.mxu0 %v179
    %v215 = vpop.f32.mrf.mxu0
    %v216 = vadd.f32 0.0, %v215
    %v217 = vpop.f32.mrf.mxu0
    %v218 = vpop.f32.mrf.mxu0
    %v219 = vpop.f32.mrf.mxu0
    %220 = vdwg.mxu0
    %v221 = vmul.f32 %v216, 0.35355338
    %v222 = vpack.c.bf16 %v221, %v221
    %v225 = vunpack.c.l.s4 1966171168
    %v226 = vunpack.c.0.s8 %v225
    %v227 = vlaneseq
    %v228 = vshrl.u32 %v227, 7
    %v229 = vsub.s32 %v226, %v228
    %v230 = vrot.slane %v222, %v229
    %v232 = vunpack.c.l.s4 1966171168
    %v233 = vunpack.c.0.s8 %v232
    %v234 = vlaneseq
    %v235 = vshrl.u32 %v234, 7
    %v236 = vsub.s32 %v233, %v235
    %v237 = vrot.slane %v230, %v236
    %v238 = vunpack.i.l.s16 %v237
    %v239 = vunpack.i.h.s16 %v237
    %v240 = vpack.i.b16 %v238, %v238
    %v241 = vpack.i.b16 %v239, %v239
    %v242 = vlaneseq
    %v243 = vshrl.u32 %v242, 7
    %v244 = vsub.s32 0, %v243
    %v245 = vrot.slane %v240, %v244
    %v246 = vlaneseq
    %v247 = vshrl.u32 %v246, 7
    %v248 = vsub.s32 0, %v247
    %v249 = vrot.slane %v241, %v248
    %v251 = vpack.i.b16 %v245, %v245
    %v253 = vlaneseq
    %v254 = vshrl.u32 %v253, 7
    %v255 = vsub.s32 0, %v254
    %v256 = vrot.slane %v251, %v255
    %v258 = vpack.i.b16 %v249, %v249
    %v260 = vlaneseq
    %v261 = vshrl.u32 %v260, 7
    %v262 = vsub.s32 0, %v261
    %v263 = vrot.slane %v258, %v262
    %v264 = vmul.bf16 %v256, %v130
    %v265 = vmul.bf16 %v263, %v131
    %v266 = vld [vmem:[%s3] sm:$0xf]
    %v267 = vld [vmem:[%s3 + $0x4] sm:$0xf]
    %v268 = vld [vmem:[%s3 + $0x8] sm:$0xf]
    %v269 = vld [vmem:[%s3 + $0xc] sm:$0xf]
    %v274 = vunpack.c.l.b16 %v266
    %v275 = vunpack.c.l.b16 %v267
    %v276 = vunpack.c.l.b16 %v268
    %v277 = vunpack.c.l.b16 %v269
    %v278 = vpack.c.b16 %v275, %v274
    %v279 = vpack.c.b16 %v277, %v276
    %vm282 = vcmask 261120
    %v284 = vsel %vm282, %v264, 0
    %v287 = vsel %vm282, %v265, 0
    %289 = vmatprep.subr.bf16.mxu0 0
    %290 = vmatpush1.bf16.msra.mxu0 0
    %291 = vmatprep.subr.bf16.mxu0 0
    %292 = vmatpush1.bf16.msra.mxu0 0
    %293 = vmatprep.subr.bf16.mxu0 0
    %294 = vmatpush1.bf16.msra.mxu0 0
    %295 = vmatprep.subr.bf16.mxu0 0
    %296 = vmatpush1.bf16.msra.mxu0 0
    %297 = vmatprep.subr.bf16.mxu0 0
    %298 = vmatpush1.bf16.msra.mxu0 0
    %299 = vmatprep.subr.bf16.mxu0 0
    %300 = vmatpush1.bf16.msra.mxu0 0
    %301 = vmatprep.subr.bf16.mxu0 0
    %302 = vmatpush1.bf16.msra.mxu0 %v279
    %303 = vmatprep.subr.bf16.mxu0 0
    %304 = vmatpush1.bf16.msra.mxu0 %v278
    %305 = vmatprep.subr.bf16.mxu0 0
    %306 = vmatpush2.bf16.msra.mxu0 0
    %307 = vmatprep.subr.bf16.mxu0 0
    %308 = vmatpush2.bf16.msra.mxu0 0
    %309 = vmatprep.subr.bf16.mxu0 0
    %310 = vmatpush2.bf16.msra.mxu0 0
    %311 = vmatprep.subr.bf16.mxu0 0
    %312 = vmatpush2.bf16.msra.mxu0 0
    %313 = vmatprep.subr.bf16.mxu0 0
    %314 = vmatpush2.bf16.msra.mxu0 0
    %315 = vmatprep.subr.bf16.mxu0 0
    %316 = vmatpush2.bf16.msra.mxu0 0
    %317 = vmatprep.subr.bf16.mxu0 0
    %318 = vmatpush2.bf16.msra.mxu0 0
    %319 = vmatprep.subr.bf16.mxu0 0
    %320 = vmatpush2.bf16.msra.mxu0 0
    %321 = vmatprep.mubr.bf16.mxu0 0
    %322 = vmatmul.mubr.bf16.gmra.mxu0 %v284
    %v323 = vpop.f32.mrf.mxu0
    %v324 = vadd.f32 0.0, %v323
    %v325 = vpop.f32.mrf.mxu0
    %v326 = vpop.f32.mrf.mxu0
    %v327 = vadd.f32 0.0, %v326
    %v328 = vpop.f32.mrf.mxu0
    %329 = vmatprep.mubr.bf16.mxu0 0
    %330 = vmatmul.mubr.bf16.gmra.mxu0 %v287
    %v331 = vpop.f32.mrf.mxu0
    %v332 = vadd.f32 0.0, %v331
    %v333 = vpop.f32.mrf.mxu0
    %v334 = vpop.f32.mrf.mxu0
    %v335 = vadd.f32 0.0, %v334
    %v336 = vpop.f32.mrf.mxu0
    %337 = vdwg.mxu0
    %vm338 = vcmask 31744
    %v339 = vsel %vm338, %v324, -inf
    %v340 = vsel %vm338, %v327, -inf
    %v341 = vmax.f32 %v339, %v340
    %v342 = vrot.slane %v341, 4
    %v343 = vmax.f32 %v341, %v342
    %v344 = vrot.slane %v343, 2
    %v345 = vmax.f32 %v343, %v344
    %v346 = vrot.slane %v345, 1
    %v347 = vmax.f32 %v345, %v346
    %v348 = vsel %vm338, %v332, -inf
    %v349 = vsel %vm338, %v335, -inf
    %v350 = vmax.f32 %v348, %v349
    %v351 = vrot.slane %v350, 4
    %v352 = vmax.f32 %v350, %v351
    %v353 = vrot.slane %v352, 2
    %v354 = vmax.f32 %v352, %v353
    %v355 = vrot.slane %v354, 1
    %v356 = vmax.f32 %v354, %v355
    %v357 = vsub.f32 %v324, %v347
    %v358 = vsub.f32 %v327, %v347
    %v359 = vsub.f32 %v332, %v356
    %v360 = vsub.f32 %v335, %v356
    %v361 = vmul.f32 %v357, 1.442695
    %v362 = vpow.pop %v361
    %v363 = vmul.f32 %v358, 1.442695
    %v364 = vpow.pop %v363
    %v365 = vmul.f32 %v359, 1.442695
    %v366 = vpow.pop %v365
    %v367 = vmul.f32 %v360, 1.442695
    %v368 = vpow.pop %v367
    %v369 = vsel %vm338, %v362, 0.0
    %v370 = vsel %vm338, %v364, 0.0
    %v371 = vadd.f32 %v369, %v370
    %v372 = vrot.slane %v371, 4
    %v373 = vadd.f32 %v371, %v372
    %v374 = vrot.slane %v373, 2
    %v375 = vadd.f32 %v373, %v374
    %v376 = vrot.slane %v375, 1
    %v377 = vadd.f32 %v375, %v376
    %v378 = vsel %vm338, %v366, 0.0
    %v379 = vsel %vm338, %v368, 0.0
    %v380 = vadd.f32 %v378, %v379
    %v381 = vrot.slane %v380, 4
    %v382 = vadd.f32 %v380, %v381
    %v383 = vrot.slane %v382, 2
    %v384 = vadd.f32 %v382, %v383
    %v385 = vrot.slane %v384, 1
    %v386 = vadd.f32 %v384, %v385
    %v387 = vrcp.pop %v377
    %v388 = vrcp.pop %v386
    %v389 = vmul.f32 %v362, %v387
    %v390 = vmul.f32 %v364, %v387
    %v391 = vmul.f32 %v366, %v388
    %v392 = vmul.f32 %v368, %v388
    %v393 = vpack.c.bf16 %v390, %v389
    %v394 = vpack.c.bf16 %v392, %v391
    %v395 = vld [vmem:[%s4] sm:$0x3]
    %v397 = vsel %vm338, %v393, 0
    %v400 = vsel %vm338, %v394, 0
    %vm402 = vcmask 1041408
    %v404 = vsel %vm402, %v395, 0
    %406 = vmatprep.subr.bf16.mxu0 0
    %407 = vmatpush1.bf16.msra.mxu0 0
    %408 = vmatprep.subr.bf16.mxu0 0
    %409 = vmatpush1.bf16.msra.mxu0 0
    %410 = vmatprep.subr.bf16.mxu0 0
    %411 = vmatpush1.bf16.msra.mxu0 0
    %412 = vmatprep.subr.bf16.mxu0 0
    %413 = vmatpush1.bf16.msra.mxu0 0
    %414 = vmatprep.subr.bf16.mxu0 0
    %415 = vmatpush1.bf16.msra.mxu0 0
    %416 = vmatprep.subr.bf16.mxu0 0
    %417 = vmatpush1.bf16.msra.mxu0 0
    %418 = vmatprep.subr.bf16.mxu0 0
    %419 = vmatpush1.bf16.msra.mxu0 0
    %420 = vmatprep.subr.bf16.mxu0 0
    %421 = vmatpush1.bf16.msra.mxu0 %v404
    %422 = vmatprep.subr.bf16.mxu0 0
    %423 = vmatpush2.bf16.msra.mxu0 0
    %424 = vmatprep.subr.bf16.mxu0 0
    %425 = vmatpush2.bf16.msra.mxu0 0
    %426 = vmatprep.subr.bf16.mxu0 0
    %427 = vmatpush2.bf16.msra.mxu0 0
    %428 = vmatprep.subr.bf16.mxu0 0
    %429 = vmatpush2.bf16.msra.mxu0 0
    %430 = vmatprep.subr.bf16.mxu0 0
    %431 = vmatpush2.bf16.msra.mxu0 0
    %432 = vmatprep.subr.bf16.mxu0 0
    %433 = vmatpush2.bf16.msra.mxu0 0
    %434 = vmatprep.subr.bf16.mxu0 0
    %435 = vmatpush2.bf16.msra.mxu0 0
    %436 = vmatprep.subr.bf16.mxu0 0
    %437 = vmatpush2.bf16.msra.mxu0 0
    %438 = vmatprep.mubr.bf16.mxu0 0
    %439 = vmatmul.mubr.bf16.gmra.mxu0 %v397
    %v440 = vpop.f32.mrf.mxu0
    %v441 = vadd.f32 0.0, %v440
    %v442 = vpop.f32.mrf.mxu0
    %v443 = vpop.f32.mrf.mxu0
    %v444 = vadd.f32 0.0, %v443
    %v445 = vpop.f32.mrf.mxu0
    %446 = vmatprep.mubr.bf16.mxu0 0
    %447 = vmatmul.mubr.bf16.gmra.mxu0 %v400
    %v448 = vpop.f32.mrf.mxu0
    %v449 = vadd.f32 0.0, %v448
    %v450 = vpop.f32.mrf.mxu0
    %v451 = vpop.f32.mrf.mxu0
    %v452 = vadd.f32 0.0, %v451
    %v453 = vpop.f32.mrf.mxu0
    %454 = vdwg.mxu0
    %v455 = vpack.c.bf16 %v444, %v441
    %v456 = vpack.c.bf16 %v452, %v449
    %459 = vrot.lane.b32.xlu0 %v130, 96
    %v460 = vpop.permute.xlu0 %459
    %461 = vrot.lane.b32.xlu0 %v131, 96
    %v462 = vpop.permute.xlu0 %461
    %v465 = vmul.bf16 %v455, %v460
    %v466 = vmul.bf16 %v456, %v462
    %v467 = vunpack.c.l.bf16 %v465
    %v468 = vunpack.c.h.bf16 %v465
    %v469 = vunpack.c.l.bf16 %v466
    %v470 = vunpack.c.h.bf16 %v466
    %v471 = vsel %vm282, %v467, 0.0
    %v472 = vsel %vm282, %v468, 0.0
    %v473 = vadd.f32 %v471, %v472
    %v474 = vrot.slane %v473, 4
    %v475 = vadd.f32 %v473, %v474
    %v476 = vrot.slane %v475, 2
    %v477 = vadd.f32 %v475, %v476
    %v478 = vrot.slane %v477, 1
    %v479 = vadd.f32 %v477, %v478
    %v480 = vsel %vm282, %v469, 0.0
    %v481 = vsel %vm282, %v470, 0.0
    %v482 = vadd.f32 %v480, %v481
    %v483 = vrot.slane %v482, 4
    %v484 = vadd.f32 %v482, %v483
    %v485 = vrot.slane %v484, 2
    %v486 = vadd.f32 %v484, %v485
    %v487 = vrot.slane %v486, 1
    %v488 = vadd.f32 %v486, %v487
    %v489 = vpack.c.bf16 %v479, %v479
    %v490 = vpack.c.bf16 %v488, %v488
    %v491 = vld [vmem:[%s5] sm:$0xf]
    %v492 = vld [vmem:[%s5 + $0x4] sm:$0xf]
    %v493 = vld [vmem:[%s5 + $0x8] sm:$0xf]
    %v494 = vld [vmem:[%s5 + $0xc] sm:$0xf]
    %v495 = vld [vmem:[%s6] sm:$0x1]
    %v497 = vlaneseq
    %v498 = vshrl.u32 %v497, 7
    %v499 = vsub.s32 0, %v498
    %v500 = vrot.slane %v495, %v499
    %v504 = vunpack.c.l.b16 %v489
    %v505 = vunpack.c.l.b16 %v490
    %v506 = vsel %vm151, %v505, %v504
    %v507 = vpack.c.b16 %v506, %v506
    %v512 = vunpack.c.l.b16 %v491
    %v513 = vunpack.c.l.b16 %v492
    %v514 = vunpack.c.l.b16 %v493
    %v515 = vunpack.c.l.b16 %v494
    %v516 = vpack.c.b16 %v513, %v512
    %v517 = vpack.c.b16 %v515, %v514
    %v521 = vsel %vm282, %v507, 0
    %523 = vmatprep.subr.bf16.mxu0 0
    %524 = vmatpush1.bf16.msra.mxu0 0
    %525 = vmatprep.subr.bf16.mxu0 0
    %526 = vmatpush1.bf16.msra.mxu0 0
    %527 = vmatprep.subr.bf16.mxu0 0
    %528 = vmatpush1.bf16.msra.mxu0 0
    %529 = vmatprep.subr.bf16.mxu0 0
    %530 = vmatpush1.bf16.msra.mxu0 0
    %531 = vmatprep.subr.bf16.mxu0 0
    %532 = vmatpush1.bf16.msra.mxu0 0
    %533 = vmatprep.subr.bf16.mxu0 0
    %534 = vmatpush1.bf16.msra.mxu0 0
    %535 = vmatprep.subr.bf16.mxu0 0
    %536 = vmatpush1.bf16.msra.mxu0 %v517
    %537 = vmatprep.subr.bf16.mxu0 0
    %538 = vmatpush1.bf16.msra.mxu0 %v516
    %539 = vmatprep.subr.bf16.mxu0 0
    %540 = vmatpush2.bf16.msra.mxu0 0
    %541 = vmatprep.subr.bf16.mxu0 0
    %542 = vmatpush2.bf16.msra.mxu0 0
    %543 = vmatprep.subr.bf16.mxu0 0
    %544 = vmatpush2.bf16.msra.mxu0 0
    %545 = vmatprep.subr.bf16.mxu0 0
    %546 = vmatpush2.bf16.msra.mxu0 0
    %547 = vmatprep.subr.bf16.mxu0 0
    %548 = vmatpush2.bf16.msra.mxu0 0
    %549 = vmatprep.subr.bf16.mxu0 0
    %550 = vmatpush2.bf16.msra.mxu0 0
    %551 = vmatprep.subr.bf16.mxu0 0
    %552 = vmatpush2.bf16.msra.mxu0 0
    %553 = vmatprep.subr.bf16.mxu0 0
    %554 = vmatpush2.bf16.msra.mxu0 0
    %555 = vmatprep.mubr.bf16.mxu0 0
    %556 = vmatmul.mubr.bf16.gmra.mxu0 %v521
    %v557 = vpop.f32.mrf.mxu0
    %v558 = vadd.f32 %v500, %v557
    %v559 = vpop.f32.mrf.mxu0
    %v560 = vpop.f32.mrf.mxu0
    %v561 = vpop.f32.mrf.mxu0
    %562 = vdwg.mxu0
    %vm563 = vcmask 517120
    %564 = vst.msk [vmem:[#allocation2] sm:$0x3] %vm563, %v558
    // Predicated region
    $region30: #{tpu_custom_call.1} parent=1 // pred_check
      _
    $region31: #{tpu_custom_call.1} parent=1 // pred_check_branch
      %566 = sbr.rel (0) target = $region33
    $region32: #{tpu_custom_call.1} parent=1 // pred_region
      %s568 = ssub.s32 32, 32
      %569 = vsyncadd [#allocation3], %s568
      %s571 = sshll.u32 [#allocation2], 4
      %s572 = int_to_ptr.vmem [resolvable:$true] %s571
      %574 = dma.vmem_to_hbm [thread:$0]  %s572, 32, %s7, [#allocation3]
    $region33: #{tpu_custom_call.1} parent=1 // pred_fallthru
      _
    // Predicated region
    $region34: #{tpu_custom_call.1} parent=1 // pred_check
      _
    $region35: #{tpu_custom_call.1} parent=1 // pred_check_branch
      %576 = sbr.rel (0) target = $region37
    $region36: #{tpu_custom_call.1} parent=1 // pred_region
      %577 = dma.done [#allocation3], 32
    $region37: #{tpu_custom_call.1} parent=1 // pred_fallthru
      _
    %578 = vsyncpa [#allocation3], 1

</llo_original>
